<compile_context>
chip_gen: v7x
topology: tpu7x:2x2x1
jax: 0.10.0
libtpu: 0.0.40
codegen_flags: <defaults>
</compile_context>

<pallas_src>
import functools

import jax
import jax.numpy as jnp
from jax.experimental import pallas as pl
from jax.experimental.pallas import tpu as pltpu


def _round_up(v, m):
    return (v + m - 1) // m * m


def _vmem_limits():
    """(vmem_limit_bytes, fused_budget_bytes), derived from the chip generation."""
    try:
        cap = int(pltpu.get_tpu_info().vmem_capacity_bytes)
    except Exception:
        cap = 64 * 1024 * 1024              # conservative (v7x-sized) default
    limit = min(cap * 3 // 4, 100 * 1024 * 1024)   # ~48 MiB v7x, ~96 MiB v5e/v6e
    budget = limit - 8 * 1024 * 1024               # headroom for Mosaic internals
    return limit, budget


# ----------------------------------------------------------------------------
# Path 1 (fused resident): one pallas_call, A / x / embedding VMEM-resident
# across all layers; only the grid's layer axis advances the recurrence.
# ----------------------------------------------------------------------------
def _fused_gcn_kernel(a_ref, x_ref, out_ref, emb_ref):
    layer = pl.program_id(1)

    @pl.when(layer == 0)
    def _():
        emb_ref[...] = x_ref[...]

    # bf16 x bf16 MXU matmul, f32 accumulation; A and emb are VMEM-resident.
    emb_ref[...] = jnp.einsum(
        "bij,bjd->bid", a_ref[...], emb_ref[...].astype(jnp.bfloat16),
        preferred_element_type=jnp.float32)

    # Lane/sublane-dense store of the full embedding slab.  The (sublane-
    # unaligned) se_num/embedding_dim slice happens in the wrapper.
    out_ref[0] = emb_ref[...]


def _gcn_fused_forward(A, x, *, num_layer, batch_block, vmem_limit):
    B, N, _ = A.shape
    Dp = x.shape[-1]
    L, bb = num_layer, batch_block

    return pl.pallas_call(
        _fused_gcn_kernel,
        out_shape=jax.ShapeDtypeStruct((L, B, N, Dp), jnp.float32),
        grid_spec=pltpu.PrefetchScalarGridSpec(
            num_scalar_prefetch=0,
            grid=(B // bb, L),                       # layer axis last (recurrence)
            in_specs=[
                # Constant block index along the layer axis -> A / x are DMA'd
                # once per batch block and stay resident across all layers.
                pl.BlockSpec((bb, N, N), lambda i, l: (i, 0, 0)),
                pl.BlockSpec((bb, N, Dp), lambda i, l: (i, 0, 0)),
            ],
            out_specs=pl.BlockSpec((1, bb, N, Dp), lambda i, l: (l, i, 0, 0)),
            scratch_shapes=[pltpu.VMEM((bb, N, Dp), jnp.float32)],
        ),
        compiler_params=pltpu.CompilerParams(
            dimension_semantics=("parallel", "arbitrary"),
            vmem_limit_bytes=vmem_limit,
        ),
        cost_estimate=pl.CostEstimate(
            flops=2 * B * L * N * N * Dp,
            transcendentals=0,
            bytes_accessed=2 * B * N * N + 4 * B * N * Dp + 4 * L * B * N * Dp,
        ),
    )(A, x)


def _fused_vmem_bytes(bb, N, Dp):
    n16, n8, nl = _round_up(N, 16), _round_up(N, 8), _round_up(N, 128)
    a = 2 * bb * n16 * nl * 2          # bf16 A, double-buffered (dominant term)
    x = 2 * bb * n8 * Dp * 4           # f32 x, double-buffered
    o = 2 * bb * n8 * Dp * 4           # f32 output slab, double-buffered
    s = bb * n8 * Dp * 4               # f32 embedding scratch
    return a + x + o + s + (2 << 20)   # slack for Mosaic internal scratch


def _pick_batch_block(B, N, Dp, budget):
    """Smallest batch block that amortizes grid-step overhead and fits VMEM.

    Capped at B//2 when B >= 2 so the 'parallel' batch axis has >= 2 blocks
    (keeps both v7x TensorCores busy and lets the pipeline prefetch the next
    block's A while this block runs its L layers)."""
    max_bb = B if B < 2 else B // 2
    divisors = [d for d in range(1, max_bb + 1) if B % d == 0]
    flop_floor = 2 * 1024 * 1024            # ~2 MFLOP per grid step
    for bb in divisors:                     # smallest first
        if (_fused_vmem_bytes(bb, N, Dp) <= budget
                and 2 * bb * N * N * Dp >= flop_floor):
            return bb
    for bb in reversed(divisors):           # tiny N: amortize step overhead
        if _fused_vmem_bytes(bb, N, Dp) <= budget:
            return bb
    return None


# ----------------------------------------------------------------------------
# Path 2 (fused streaming): A streams from HBM per layer; the running
# embedding lives in a (2, N_pad, Dp) VMEM ping-pong scratch, so the
# [B, N, D] intermediate never round-trips HBM between layers.
# ----------------------------------------------------------------------------
def _stream_gcn_kernel(a_ref, x_hbm, out_ref, emb_ref, acc_ref, *, tm, tk):
    b = pl.program_id(0)
    l = pl.program_id(1)
    m = pl.program_id(2)
    k = pl.program_id(3)
    nk = pl.num_programs(3)

    # One-time (per batch element) DMA of x into ping-pong slot 0.
    @pl.when((l == 0) & (m == 0) & (k == 0))
    def _():
        pltpu.sync_copy(x_hbm.at[b], emb_ref.at[0])

    @pl.when(k == 0)
    def _():
        acc_ref[...] = jnp.zeros_like(acc_ref)

    def step(src, dst):
        ks = pl.multiple_of(k * tk, tk)
        acc_ref[...] += jnp.dot(
            a_ref[0], src[pl.ds(ks, tk), :].astype(jnp.bfloat16),
            preferred_element_type=jnp.float32)

        @pl.when(k == nk - 1)
        def _():
            ms = pl.multiple_of(m * tm, tm)
            dst[pl.ds(ms, tm), :] = acc_ref[...]      # feed next layer
            out_ref[0, 0] = acc_ref[...]              # lane-dense HBM writeback

    parity = l % 2

    @pl.when(parity == 0)
    def _():
        step(emb_ref.at[0], emb_ref.at[1])

    @pl.when(parity == 1)
    def _():
        step(emb_ref.at[1], emb_ref.at[0])


def _gcn_stream_forward(A, x, *, num_layer, tm, tk, vmem_limit):
    B, Np, _ = A.shape
    Dp = x.shape[-1]
    L = num_layer
    kernel = functools.partial(_stream_gcn_kernel, tm=tm, tk=tk)
    return pl.pallas_call(
        kernel,
        out_shape=jax.ShapeDtypeStruct((L, B, Np, Dp), jnp.float32),
        grid_spec=pltpu.PrefetchScalarGridSpec(
            num_scalar_prefetch=0,
            grid=(B, L, Np // tm, Np // tk),          # reduction axis last
            in_specs=[
                pl.BlockSpec((1, tm, tk), lambda b, l, m, k: (b, m, k)),  # A streams
                pl.BlockSpec(memory_space=pl.ANY),                        # x in HBM
            ],
            out_specs=pl.BlockSpec((1, 1, tm, Dp),
                                   lambda b, l, m, k: (l, b, m, 0)),
            scratch_shapes=[
                pltpu.VMEM((2, Np, Dp), jnp.float32),   # embedding ping-pong
                pltpu.VMEM((tm, Dp), jnp.float32),      # f32 accumulator
            ],
        ),
        compiler_params=pltpu.CompilerParams(
            dimension_semantics=("parallel", "arbitrary", "arbitrary", "arbitrary"),
            vmem_limit_bytes=vmem_limit,
        ),
        cost_estimate=pl.CostEstimate(
            flops=2 * B * L * Np * Np * Dp,
            transcendentals=0,
            bytes_accessed=(2 * B * L * Np * Np + 4 * B * Np * Dp
                            + 4 * L * B * Np * Dp),
        ),
    )(A, x)


def _stream_vmem_bytes(Np, Dp, tm, tk):
    a = 2 * tm * tk * 2                 # bf16 A tile, double-buffered
    o = 2 * tm * Dp * 4                 # f32 out block, double-buffered
    emb = 2 * Np * Dp * 4               # f32 ping-pong scratch
    acc = tm * Dp * 4
    return a + o + emb + acc + (2 << 20)


# ----------------------------------------------------------------------------
# Path 3 (last resort, huge N): per-layer tiled batched matmul, E streamed.
# ----------------------------------------------------------------------------
def _tiled_bmm_kernel(a_ref, e_ref, o_ref, acc_ref):
    k = pl.program_id(2)

    @pl.when(k == 0)
    def _():
        acc_ref[...] = jnp.zeros_like(acc_ref)

    acc_ref[...] += jnp.dot(a_ref[0], e_ref[0].astype(jnp.bfloat16),
                            preferred_element_type=jnp.float32)

    @pl.when(k == pl.num_programs(2) - 1)
    def _():
        o_ref[0] = acc_ref[...]


def _tiled_bmm(A, E, *, tm, tk, vmem_limit):
    B, Np, _ = A.shape
    Dp = E.shape[-1]
    return pl.pallas_call(
        _tiled_bmm_kernel,
        out_shape=jax.ShapeDtypeStruct((B, Np, Dp), jnp.float32),
        grid_spec=pltpu.PrefetchScalarGridSpec(
            num_scalar_prefetch=0,
            grid=(B, Np // tm, Np // tk),
            in_specs=[
                pl.BlockSpec((1, tm, tk), lambda b, m, k: (b, m, k)),
                pl.BlockSpec((1, tk, Dp), lambda b, m, k: (b, k, 0)),
            ],
            out_specs=pl.BlockSpec((1, tm, Dp), lambda b, m, k: (b, m, 0)),
            scratch_shapes=[pltpu.VMEM((tm, Dp), jnp.float32)],
        ),
        compiler_params=pltpu.CompilerParams(
            dimension_semantics=("parallel", "parallel", "arbitrary"),
            vmem_limit_bytes=vmem_limit,
        ),
    )(A, E)


# ----------------------------------------------------------------------------
# Module wrapper.
# ----------------------------------------------------------------------------
class GCNEmbeddingPallas:
    """JAX/Pallas port of GCNEmbedding (the module has no learned parameters)."""

    def __init__(self, num_layer, embedding_dim, se_num, batch_size, seq_len,
                 layer_size=(64, 64, 64), force_path=None):
        self.num_layer = num_layer
        self.embedding_dim = embedding_dim
        self.se_num = se_num
        self.batch_size = batch_size
        self.seq_len = seq_len
        self.force_path = force_path        # None | "fused" | "stream" | "tiled"
        self._vmem_limit, self._vmem_budget = _vmem_limits()

    def __call__(self, A, x):
        B, N, _ = A.shape
        D = x.shape[-1]
        if self.se_num + self.seq_len > N:
            raise ValueError("se_num + seq_len exceeds the number of nodes N")
        if self.embedding_dim > D:
            raise ValueError("embedding_dim exceeds the feature dimension D")

        # bf16 operands (MXU-native on v5e/v6e/v7x); accumulation stays f32.
        A = A.astype(jnp.bfloat16)
        x = x.astype(jnp.float32)
        # Lane-dense feature dim: pad D to a multiple of 128 once, up front.
        # Padded columns stay zero through every layer (exact).
        Dp = _round_up(D, 128)
        if Dp != D:
            x = jnp.pad(x, ((0, 0), (0, 0), (0, Dp - D)))

        se, sl, ed, L = self.se_num, self.seq_len, self.embedding_dim, self.num_layer

        path = self.force_path
        bb = _pick_batch_block(B, N, Dp, self._vmem_budget)
        if path is None and bb is not None:
            path = "fused"
        if path == "fused":
            if bb is None:
                raise ValueError("fused path does not fit VMEM for these shapes")
            stacked = _gcn_fused_forward(A, x, num_layer=L, batch_block=bb,
                                         vmem_limit=self._vmem_limit)
            return [stacked[k, :, se:se + sl, :ed] for k in range(L)]

        # Non-resident paths: pad N to a multiple of 128 (exact: padded rows /
        # cols of A are zero, so valid rows are unchanged and padded rows stay 0).
        Np = _round_up(N, 128)
        if Np != N:
            A = jnp.pad(A, ((0, 0), (0, Np - N), (0, Np - N)))
            x = jnp.pad(x, ((0, 0), (0, Np - N), (0, 0)))
        tm = 512 if Np % 512 == 0 else (256 if Np % 256 == 0 else 128)
        tk = 128

        if path is None:
            path = ("stream"
                    if _stream_vmem_bytes(Np, Dp, tm, tk) <= self._vmem_budget
                    else "tiled")

        if path == "stream":
            stacked = _gcn_stream_forward(A, x, num_layer=L, tm=tm, tk=tk,
                                          vmem_limit=self._vmem_limit)
            return [stacked[k, :, se:se + sl, :ed] for k in range(L)]

        # Last resort: per-layer tiled bmm with the embedding streamed per tile.
        emb = x
        outs = []
        for _ in range(L):
            emb = _tiled_bmm(A, emb, tm=tm, tk=tk, vmem_limit=self._vmem_limit)
            outs.append(emb[:, se:se + sl, :ed])
        return outs


# ----------------------------------------------------------------------------
# Self-test.
# ----------------------------------------------------------------------------
def _make_inputs(key, B, N, D):
    ka, kx = jax.random.split(key)
    # Scale A ~ 1/sqrt(N) so magnitudes stay O(1) across layers; round inputs
    # to bf16-exact values so the bf16-operand MXU matmuls see the same
    # operands as the f32 reference.
    A = jax.random.normal(ka, (B, N, N), jnp.float32) / (N ** 0.5)
    x = jax.random.normal(kx, (B, N, D), jnp.float32)
    return (A.astype(jnp.bfloat16).astype(jnp.float32),
            x.astype(jnp.bfloat16).astype(jnp.float32))


def _reference(A, x, num_layer, se_num, seq_len, embedding_dim):
    emb = x
    refs = []
    for _ in range(num_layer):
        emb = jnp.einsum("bij,bjd->bid", A, emb)
        refs.append(emb[:, se_num:se_num + seq_len, :embedding_dim])
    return refs


def _check(outs, refs, shape):
    # Tolerance covers bf16-operand MXU rounding vs. the XLA reference; real
    # bugs produce O(1) errors.
    ok = True
    for o, r in zip(outs, refs):
        assert o.shape == shape, (o.shape, shape)
        ok = ok and bool(jnp.allclose(o, r, atol=5e-2, rtol=5e-2))
    return ok


if __name__ == "__main__":
    ok = True

    # ---- Case 1: small shapes -> fused VMEM-resident path ------------------
    batch, se_num, seq_len = 2, 4, 8
    num_nodes = se_num + seq_len + 4          # N = 16
    feat_dim, embedding_dim, num_layer = 16, 8, 3
    A, x = _make_inputs(jax.random.PRNGKey(0), batch, num_nodes, feat_dim)
    refs = _reference(A, x, num_layer, se_num, seq_len, embedding_dim)

    model = GCNEmbeddingPallas(num_layer, embedding_dim, se_num, batch, seq_len)
    outs = [jax.block_until_ready(o) for o in model(A, x)]
    ok = ok and _check(outs, refs, (batch, seq_len, embedding_dim))

    # ---- Case 2: same shapes via the layer-fused streaming fallback --------
    model_s = GCNEmbeddingPallas(num_layer, embedding_dim, se_num, batch,
                                 seq_len, force_path="stream")
    outs_s = [jax.block_until_ready(o) for o in model_s(A, x)]
    ok = ok and _check(outs_s, refs, (batch, seq_len, embedding_dim))

    # ---- Case 3: medium shape (multi-tile, padded N) via streaming path ----
    b2, se2, sl2, n2, d2, e2, l2 = 1, 8, 16, 320, 32, 16, 2
    A2, x2 = _make_inputs(jax.random.PRNGKey(1), b2, n2, d2)
    refs2 = _reference(A2, x2, l2, se2, sl2, e2)
    model2 = GCNEmbeddingPallas(l2, e2, se2, b2, sl2, force_path="stream")
    outs2 = [jax.block_until_ready(o) for o in model2(A2, x2)]
    ok = ok and _check(outs2, refs2, (b2, sl2, e2))

    # ---- Case 4: medium shape via the last-resort per-layer tiled path -----
    model3 = GCNEmbeddingPallas(l2, e2, se2, b2, sl2, force_path="tiled")
    outs3 = [jax.block_until_ready(o) for o in model3(A2, x2)]
    ok = ok and _check(outs3, refs2, (b2, sl2, e2))

    if ok:
        print("KERNEL_OK")
</pallas_src>

<mosaic_0001>
module attributes {stable_mosaic.version = 11 : i64} {
  func.func @_fused_gcn_kernel(%arg0: i32, %arg1: i32, %arg2: memref<1x16x16xbf16, #tpu.memory_space<vmem>>, %arg3: memref<1x16x128xf32, #tpu.memory_space<vmem>>, %arg4: memref<1x1x16x128xf32, #tpu.memory_space<vmem>>, %arg5: memref<1x16x128xf32, #tpu.memory_space<vmem>>) attributes {dimension_semantics = [#tpu.dimension_semantics<parallel>, #tpu.dimension_semantics<arbitrary>], iteration_bounds = array<i64: 2, 3>, scalar_prefetch = 0 : i64, scratch_operands = 1 : i64, tpu.core_type = #tpu.core_type<tc>, window_params = [{transform_indices = @transform_0, window_bounds = array<i64: 1, 16, 16>}, {transform_indices = @transform_1, window_bounds = array<i64: 1, 16, 128>}, {transform_indices = @transform_2, window_bounds = array<i64: 1, 1, 16, 128>}]} {
    %c0_i32 = arith.constant 0 : i32
    %0 = arith.cmpi eq, %arg1, %c0_i32 : i32
    %1 = arith.extui %0 : i1 to i32
    %c0_i32_0 = arith.constant 0 : i32
    %2 = arith.cmpi ne, %1, %c0_i32_0 : i32
    scf.if %2 {
      %c0_16 = arith.constant 0 : index
      %c0_17 = arith.constant 0 : index
      %c0_18 = arith.constant 0 : index
      %12 = vector.load %arg3[%c0_16, %c0_17, %c0_18] : memref<1x16x128xf32, #tpu.memory_space<vmem>>, vector<1x16x128xf32>
      %c0_19 = arith.constant 0 : index
      %c0_20 = arith.constant 0 : index
      %c0_21 = arith.constant 0 : index
      %13 = vector.load %arg5[%c0_19, %c0_20, %c0_21] : memref<1x16x128xf32, #tpu.memory_space<vmem>>, vector<1x16x128xf32>
      tpu.vector_store %arg5[%c0_19, %c0_20, %c0_21], %12 {strides = array<i32>} : memref<1x16x128xf32, #tpu.memory_space<vmem>>, vector<1x16x128xf32>,
    } else {
    }
    %c0 = arith.constant 0 : index
    %c0_1 = arith.constant 0 : index
    %c0_2 = arith.constant 0 : index
    %3 = vector.load %arg2[%c0, %c0_1, %c0_2] : memref<1x16x16xbf16, #tpu.memory_space<vmem>>, vector<1x16x16xbf16>
    %c0_3 = arith.constant 0 : index
    %c0_4 = arith.constant 0 : index
    %c0_5 = arith.constant 0 : index
    %4 = vector.load %arg5[%c0_3, %c0_4, %c0_5] : memref<1x16x128xf32, #tpu.memory_space<vmem>>, vector<1x16x128xf32>
    %5 = arith.truncf %4 : vector<1x16x128xf32> to vector<1x16x128xbf16>
    "tpu.trace_start"() <{level = 10 : i32, message = "bij,bjd->bid"}> : () -> ()
    %cst = arith.constant dense<0.000000e+00> : vector<1x16x128xf32>
    %6 = tpu.matmul %3, %5, %cst {dimension_numbers = #tpu.dot_dimension_numbers<[2], [1], [1], [2], [0, 0, 0, 1, 1, 2], [0], [0]>} : vector<1x16x16xbf16>, vector<1x16x128xbf16>, vector<1x16x128xf32> -> vector<1x16x128xf32>
    "tpu.trace_stop"() : () -> ()
    %c0_6 = arith.constant 0 : index
    %c0_7 = arith.constant 0 : index
    %c0_8 = arith.constant 0 : index
    %7 = vector.load %arg5[%c0_6, %c0_7, %c0_8] : memref<1x16x128xf32, #tpu.memory_space<vmem>>, vector<1x16x128xf32>
    tpu.vector_store %arg5[%c0_6, %c0_7, %c0_8], %6 {strides = array<i32>} : memref<1x16x128xf32, #tpu.memory_space<vmem>>, vector<1x16x128xf32>,
    %c0_9 = arith.constant 0 : index
    %c0_10 = arith.constant 0 : index
    %c0_11 = arith.constant 0 : index
    %8 = vector.load %arg5[%c0_9, %c0_10, %c0_11] : memref<1x16x128xf32, #tpu.memory_space<vmem>>, vector<1x16x128xf32>
    %c0_12 = arith.constant 0 : index
    %c0_13 = arith.constant 0 : index
    %c0_14 = arith.constant 0 : index
    %c0_15 = arith.constant 0 : index
    %9 = vector.load %arg4[%c0_12, %c0_13, %c0_14, %c0_15] : memref<1x1x16x128xf32, #tpu.memory_space<vmem>>, vector<1x1x16x128xf32>
    %10 = vector.shape_cast %9 : vector<1x1x16x128xf32> to vector<1x16x128xf32>
    %11 = vector.shape_cast %8 : vector<1x16x128xf32> to vector<1x1x16x128xf32>
    tpu.vector_store %arg4[%c0_12, %c0_13, %c0_14, %c0_15], %11 {strides = array<i32>} : memref<1x1x16x128xf32, #tpu.memory_space<vmem>>, vector<1x1x16x128xf32>,
    return
  }
  func.func @transform_0(%arg0: i32, %arg1: i32) -> (i32, i32, i32) {
    %c0_i32 = arith.constant 0 : i32
    %c0_i32_0 = arith.constant 0 : i32
    %c0_i32_1 = arith.constant 0 : i32
    return %arg0, %c0_i32, %c0_i32_0 : i32, i32, i32
  }
  func.func @transform_1(%arg0: i32, %arg1: i32) -> (i32, i32, i32) {
    %c0_i32 = arith.constant 0 : i32
    %c0_i32_0 = arith.constant 0 : i32
    %c0_i32_1 = arith.constant 0 : i32
    return %arg0, %c0_i32, %c0_i32_0 : i32, i32, i32
  }
  func.func @transform_2(%arg0: i32, %arg1: i32) -> (i32, i32, i32, i32) {
    %c0_i32 = arith.constant 0 : i32
    %c0_i32_0 = arith.constant 0 : i32
    %c0_i32_1 = arith.constant 0 : i32
    return %arg1, %arg0, %c0_i32, %c0_i32_0 : i32, i32, i32, i32
  }
}

</mosaic_0001>

<llo_original>
// kernel: tpu_custom_call.1
$region0: #{tpu_custom_call.1}
  #allocation0 [shape = 'u32[]', space=smem, size = 0x4, offset = 0x4, fixed_abs, tag = 'smem constant byte address 0x4 - core index']
  #allocation1 [shape = 'u32[144,128]{1,0:T(1,128)}', space=vmem, size = 0x12000, scoped, tag = 'internal scratch']
  #allocation2 [shape = 'f32[1,16,128]{2,1,0:T(8,128)}', space=vmem, size = 0x2000, scoped, tag = 'scratch operand']
  %s0 = inlined_call_operand.hbm [shape: bf16[2,16,16], index: 0, kind: input, shape index: {}]
  %s1 = inlined_call_operand.hbm [shape: f32[2,16,128], index: 1, kind: input, shape index: {}]
  %s2 = inlined_call_operand.hbm [shape: f32[3,2,16,128], index: 2, kind: output, shape index: {}]
  %s3 = sld [smem:[#allocation0]]
  $region53: #{tpu_custom_call.1} parent=0
    _
  %s5 = ssub.s32 1, %s3
  %s6 = scalar_select 0, %s5, %s3
  $region1: #{tpu_custom_call.1} parent=0
    #allocation3 [shape = 'u8[8192]{0}', space=vmem, size = 0x2000, scoped, tag = 'input window, operand 0']
    #allocation4 [shape = 's32[2]{0}', space=sflag, size = 0x8, scoped, tag = 'scoped memory for tpu_custom_call.1']
    #allocation5 [shape = 's32[2]{0}', space=sflag, size = 0x8, scoped, tag = 'scoped memory for tpu_custom_call.1']
    #allocation6 [shape = 'u8[16384]{0}', space=vmem, size = 0x4000, scoped, tag = 'input window, operand 1']
    #allocation7 [shape = 's32[2]{0}', space=sflag, size = 0x8, scoped, tag = 'scoped memory for tpu_custom_call.1']
    #allocation8 [shape = 'u8[16384]{0}', space=vmem, size = 0x4000, scoped, tag = 'output window, operand 0']
    %7 = vsyncpa [#allocation4], 0
    %s8 = scalar_lea.sflag [#allocation4], 1
    %9 = vsyncpa %s8, 0
    %10 = vsyncpa [#allocation7], 0
    %s11 = scalar_lea.sflag [#allocation7], 1
    %12 = vsyncpa %s11, 0
    %13 = vsyncpa [#allocation5], 0
    %s14 = scalar_lea.sflag [#allocation5], 1
    %15 = vsyncpa %s14, 0
    loop: start=0, step=1, limit=8
    $region2: #{tpu_custom_call.1} parent=1 // loop_pre_header
      _
    $region3: #{tpu_custom_call.1} parent=1 // loop_header
      %s17 = sphi 0, %s21
      %p18 = scmp.ge.s32.totalorder %s17, 8
      %s24 = sphi 0, %s36
      %s25 = sphi 0, %s32
      %s26 = sphi 0, %s24
      %s27 = sphi 0, %s25
      %s28 = sphi 0, %s26
      %s29 = sphi 0, %s27
      %s39 = sphi 0, %s41
      %s42 = sphi 0, %s39
      %s43 = sphi 0, %s42
      %s59 = sphi 0, %s43
      %s65 = sphi 0, %s67
      %s68 = sphi 0, %s65
      %s69 = sphi 0, %s68
      %s85 = sphi 0, %s69
      %s93 = sphi 0, %s95
      %s96 = sphi 0, %s93
      %s97 = sphi 0, %s96
      %s113 = sphi 0, %s97
    $region4: #{tpu_custom_call.1} parent=1 // loop_header_branch
      %20 = sbr.rel (%p18) target = $region8
    $region5: #{tpu_custom_call.1} parent=1 // loop_body
      %s22 = ssub.s32 %s17, 1
      %s23 = ssub.s32 %s17, 2
      %s30 = sadd.s32 1, %s25
      %p31 = scmp.ge.s32.totalorder %s30, 3
      %s32 = scalar_select %p31, 0, %s30
      %s33 = sadd.s32 1, %s24
      %s34 = scalar_select %p31, %s33, %s24
      %p35 = scmp.ge.s32.totalorder %s34, 2
      %s36 = scalar_select %p35, 0, %s34
      %s37 = ssub.s32 %s24, %s36
      %p38 = scmp.eq.s32.totalorder %s37, 0
      %s40 = sadd.s32 %s39, 1
      %s41 = scalar_select %p38, %s39, %s40
      %p44 = pneg %p38
      %p45 = scmp.eq.s32.totalorder %s17, 5
      %p46 = por %p44, %p45
      %p47 = scmp.ne.s32.totalorder %s39, %s42
      %p48 = scmp.eq.s32.totalorder %s17, 0
      %p49 = por %p47, %p48
      %p50 = scmp.ne.s32.totalorder %s39, %s42
      %p51 = scmp.eq.s32.totalorder %s22, 5
      %p52 = por %p50, %p51
      %p53 = scmp.ne.s32.totalorder %s42, %s43
      %p54 = scmp.eq.s32.totalorder %s22, 0
      %p55 = por %p53, %p54
      %p56 = scmp.ne.s32.totalorder %s42, %s43
      %p57 = scmp.eq.s32.totalorder %s23, 5
      %p58 = por %p56, %p57
      %p60 = scmp.ne.s32.totalorder %s43, %s59
      %p61 = scmp.eq.s32.totalorder %s23, 0
      %p62 = por %p60, %p61
      %s63 = ssub.s32 %s24, %s36
      %p64 = scmp.eq.s32.totalorder %s63, 0
      %s66 = sadd.s32 %s65, 1
      %s67 = scalar_select %p64, %s65, %s66
      %p70 = pneg %p64
      %p71 = scmp.eq.s32.totalorder %s17, 5
      %p72 = por %p70, %p71
      %p73 = scmp.ne.s32.totalorder %s65, %s68
      %p74 = scmp.eq.s32.totalorder %s17, 0
      %p75 = por %p73, %p74
      %p76 = scmp.ne.s32.totalorder %s65, %s68
      %p77 = scmp.eq.s32.totalorder %s22, 5
      %p78 = por %p76, %p77
      %p79 = scmp.ne.s32.totalorder %s68, %s69
      %p80 = scmp.eq.s32.totalorder %s22, 0
      %p81 = por %p79, %p80
      %p82 = scmp.ne.s32.totalorder %s68, %s69
      %p83 = scmp.eq.s32.totalorder %s23, 5
      %p84 = por %p82, %p83
      %p86 = scmp.ne.s32.totalorder %s69, %s85
      %p87 = scmp.eq.s32.totalorder %s23, 0
      %p88 = por %p86, %p87
      %s89 = ssub.s32 %s25, %s32
      %s90 = ssub.s32 %s24, %s36
      %s91 = sor.u32 %s89, %s90
      %p92 = scmp.eq.s32.totalorder %s91, 0
      %s94 = sadd.s32 %s93, 1
      %s95 = scalar_select %p92, %s93, %s94
      %p98 = pneg %p92
      %p99 = scmp.eq.s32.totalorder %s17, 5
      %p100 = por %p98, %p99
      %p101 = scmp.ne.s32.totalorder %s93, %s96
      %p102 = scmp.eq.s32.totalorder %s17, 0
      %p103 = por %p101, %p102
      %p104 = scmp.ne.s32.totalorder %s93, %s96
      %p105 = scmp.eq.s32.totalorder %s22, 5
      %p106 = por %p104, %p105
      %p107 = scmp.ne.s32.totalorder %s96, %s97
      %p108 = scmp.eq.s32.totalorder %s22, 0
      %p109 = por %p107, %p108
      %p110 = scmp.ne.s32.totalorder %s96, %s97
      %p111 = scmp.eq.s32.totalorder %s23, 5
      %p112 = por %p110, %p111
      %p114 = scmp.ne.s32.totalorder %s97, %s113
      %p115 = scmp.eq.s32.totalorder %s23, 0
      %p116 = por %p114, %p115
      %p117 = scmp.le.s32.totalorder 1, %s17
      %p118 = scmp.lt.s32.totalorder %s17, 7
      %p119 = pnand %p117, %p118
      %p120 = pneg %p119
      // Predicated region
      $region9: #{tpu_custom_call.1} parent=5 // pred_check
        _
      $region10: #{tpu_custom_call.1} parent=5 // pred_check_branch
        %122 = sbr.rel (%p119) target = $region12
      $region11: #{tpu_custom_call.1} parent=5 // pred_region
        %s123 = ssub.s32 %s17, 1
      $region12: #{tpu_custom_call.1} parent=5 // pred_fallthru
        _
      %p124 = scmp.lt.s32.totalorder %s17, 6
      // Predicated region
      $region13: #{tpu_custom_call.1} parent=5 // pred_check
        %p125 = pneg %p124
      $region14: #{tpu_custom_call.1} parent=5 // pred_check_branch
        %127 = sbr.rel (%p125) target = $region16
      $region15: #{tpu_custom_call.1} parent=5 // pred_region
        // Predicated region
        $region17: #{tpu_custom_call.1} parent=15 // pred_check
          %p128 = pneg %p49
        $region18: #{tpu_custom_call.1} parent=15 // pred_check_branch
          %130 = sbr.rel (%p128) target = $region20
        $region19: #{tpu_custom_call.1} parent=15 // pred_region
          %s131 = sand.u32 %s39, 1
          %s132 = scalar_lea.sflag [#allocation4], %s131
          %s133 = sand.u32 %s39, 1
          %s134 = smul.addr %s133, 8
          %s135 = scalar_lea.vmem [#allocation3], %s134
          %s137 = ssub.s32 128, 128
          %138 = vsyncadd %s132, %s137
          %s139 = smul.addr %s24, 2
          %s140 = smul.addr %s139, 64
          %s141 = scalar_lea.hbm %s0, %s140
          %s142 = sshll.u32 %s135, 4
          %s143 = int_to_ptr.vmem [resolvable:$true] %s142
          %148 = dma.hbm_to_vmem [thread:$0]  %s141, 128, %s143, %s132, 64, 64, 4
        $region20: #{tpu_custom_call.1} parent=15 // pred_fallthru
          _
        // Predicated region
        $region21: #{tpu_custom_call.1} parent=15 // pred_check
          %p149 = pneg %p75
        $region22: #{tpu_custom_call.1} parent=15 // pred_check_branch
          %151 = sbr.rel (%p149) target = $region24
        $region23: #{tpu_custom_call.1} parent=15 // pred_region
          %s152 = sand.u32 %s65, 1
          %s153 = scalar_lea.sflag [#allocation7], %s152
          %s154 = sand.u32 %s65, 1
          %s155 = smul.addr %s154, 16
          %s156 = scalar_lea.vmem [#allocation6], %s155
          %s158 = ssub.s32 256, 256
          %159 = vsyncadd %s153, %s158
          %s160 = smul.addr %s24, 2
          %s161 = smul.addr %s160, 128
          %s162 = scalar_lea.hbm %s1, %s161
          %s163 = sshll.u32 %s156, 4
          %s164 = int_to_ptr.vmem [resolvable:$true] %s163
          %169 = dma.hbm_to_vmem [thread:$0]  %s162, 256, %s164, %s153, 128, 128, 8
        $region24: #{tpu_custom_call.1} parent=15 // pred_fallthru
          _
      $region16: #{tpu_custom_call.1} parent=5 // pred_fallthru
        _
      %p170 = scmp.le.s32.totalorder 1, %s17
      %p171 = scmp.lt.s32.totalorder %s17, 7
      %p172 = pnand %p170, %p171
      %p173 = pneg %p172
      // Predicated region
      $region25: #{tpu_custom_call.1} parent=5 // pred_check
        _
      $region26: #{tpu_custom_call.1} parent=5 // pred_check_branch
        %175 = sbr.rel (%p172) target = $region28
      $region27: #{tpu_custom_call.1} parent=5 // pred_region
        %s176 = ssub.s32 %s17, 1
        %s177 = sand.u32 %s42, 1
        %s178 = scalar_lea.sflag [#allocation4], %s177
        %s179 = sand.u32 %s42, 1
        %s180 = smul.addr %s179, 8
        %s181 = scalar_lea.vmem [#allocation3], %s180
        // Predicated region
        $region29: #{tpu_custom_call.1} parent=27 // pred_check
          %p182 = pneg %p55
        $region30: #{tpu_custom_call.1} parent=27 // pred_check_branch
          %184 = sbr.rel (%p182) target = $region32
        $region31: #{tpu_custom_call.1} parent=27 // pred_region
          %185 = dma.done %s178, 128
        $region32: #{tpu_custom_call.1} parent=27 // pred_fallthru
          _
        %s186 = sand.u32 %s68, 1
        %s187 = scalar_lea.sflag [#allocation7], %s186
        %s188 = sand.u32 %s68, 1
        %s189 = smul.addr %s188, 16
        %s190 = scalar_lea.vmem [#allocation6], %s189
        // Predicated region
        $region33: #{tpu_custom_call.1} parent=27 // pred_check
          %p191 = pneg %p81
        $region34: #{tpu_custom_call.1} parent=27 // pred_check_branch
          %193 = sbr.rel (%p191) target = $region36
        $region35: #{tpu_custom_call.1} parent=27 // pred_region
          %194 = dma.done %s187, 256
        $region36: #{tpu_custom_call.1} parent=27 // pred_fallthru
          _
        %s195 = sand.u32 %s42, 1
        %s196 = scalar_lea.sflag [#allocation4], %s195
        %s197 = sand.u32 %s42, 1
        %s198 = smul.addr %s197, 8
        %s199 = scalar_lea.vmem [#allocation3], %s198
        %p200 = pneg %p55
        %p201 = pneg %p52
        %s202 = sand.u32 %s68, 1
        %s203 = scalar_lea.sflag [#allocation7], %s202
        %s204 = sand.u32 %s68, 1
        %s205 = smul.addr %s204, 16
        %s206 = scalar_lea.vmem [#allocation6], %s205
        %p207 = pneg %p81
        %p208 = pneg %p78
        %p209 = pneg %p109
        %p210 = pneg %p106
        %s211 = sand.u32 %s96, 1
        %s212 = scalar_lea.sflag [#allocation5], %s211
        %s213 = sand.u32 %s96, 1
        %s214 = smul.addr %s213, 16
        %s215 = scalar_lea.vmem [#allocation8], %s214
        %p217 = scmp.eq.s32.totalorder %s27, 0
        // Predicated region
        $region37: #{tpu_custom_call.1} parent=27 // pred_check
          %p218 = pneg %p217
        $region38: #{tpu_custom_call.1} parent=27 // pred_check_branch
          %220 = sbr.rel (%p218) target = $region40
        $region39: #{tpu_custom_call.1} parent=27 // pred_region
          %v221 = vld [vmem:[%s190] sm:$0xff]
          %v222 = vld [vmem:[%s190 + $0x8] sm:$0xff]
          %223 = vst [vmem:[#allocation2] sm:$0xff] %v221
          %224 = vst [vmem:[#allocation2 + $0x8] sm:$0xff] %v222
        $region40: #{tpu_custom_call.1} parent=27 // pred_fallthru
          _
        %v225 = vld [vmem:[%s181] sm:$0xf]
        %v226 = vld [vmem:[%s181 + $0x4] sm:$0xf]
        %v227 = vld [vmem:[#allocation2] sm:$0xff]
        %v228 = vld [vmem:[#allocation2 + $0x8] sm:$0xff]
        %v229 = vpack.c.bf16 %v228, %v227
        %v232 = vunpack.c.l.b16 %v225
        %v233 = vunpack.c.l.b16 %v226
        %v234 = vpack.c.b16 %v233, %v232
        %vm235 = vcmask 130048
        %v237 = vsel %vm235, %v234, 0
        %239 = vmatprep.subr.bf16.mxu0 0
        %240 = vmatpush1.bf16.msra.mxu0 %v229
        %241 = vmatprep.subr.bf16.mxu0 0
        %242 = vmatpush1.bf16.msra.mxu0 0
        %243 = vmatprep.subr.bf16.mxu0 0
        %244 = vmatpush1.bf16.msra.mxu0 0
        %245 = vmatprep.subr.bf16.mxu0 0
        %246 = vmatpush1.bf16.msra.mxu0 0
        %247 = vmatprep.subr.bf16.mxu0 0
        %248 = vmatpush1.bf16.msra.mxu0 0
        %249 = vmatprep.subr.bf16.mxu0 0
        %250 = vmatpush1.bf16.msra.mxu0 0
        %251 = vmatprep.subr.bf16.mxu0 0
        %252 = vmatpush1.bf16.msra.mxu0 0
        %253 = vmatprep.subr.bf16.mxu0 0
        %254 = vmatpush1.bf16.msra.mxu0 0
        %255 = vmatprep.subr.bf16.mxu0 0
        %256 = vmatpush1.bf16.msra.mxu0 0
        %257 = vmatprep.subr.bf16.mxu0 0
        %258 = vmatpush1.bf16.msra.mxu0 0
        %259 = vmatprep.subr.bf16.mxu0 0
        %260 = vmatpush1.bf16.msra.mxu0 0
        %261 = vmatprep.subr.bf16.mxu0 0
        %262 = vmatpush1.bf16.msra.mxu0 0
        %263 = vmatprep.subr.bf16.mxu0 0
        %264 = vmatpush1.bf16.msra.mxu0 0
        %265 = vmatprep.subr.bf16.mxu0 0
        %266 = vmatpush1.bf16.msra.mxu0 0
        %267 = vmatprep.subr.bf16.mxu0 0
        %268 = vmatpush1.bf16.msra.mxu0 0
        %269 = vmatprep.subr.bf16.mxu0 0
        %270 = vmatpush1.bf16.msra.mxu0 0
        %271 = vmatprep.mubr.bf16.mxu0 0
        %272 = vmatmul.mubr.bf16.gmra.mrb[0].mxu0 %v237
        %v273 = vpop.f32.mrb[0].mxu0
        %v274 = vadd.f32 0.0, %v273
        %v275 = vpop.f32.mrb[0].mxu0
        %v276 = vpop.f32.mrb[0].mxu0
        %v277 = vadd.f32 0.0, %v276
        %v278 = vpop.f32.mrb[0].mxu0
        %279 = vdwg.mxu0
        %280 = vst [vmem:[#allocation2] sm:$0xff] %v274
        %281 = vst [vmem:[#allocation2 + $0x8] sm:$0xff] %v277
        %v282 = vld [vmem:[#allocation2] sm:$0xff]
        %v283 = vld [vmem:[#allocation2 + $0x8] sm:$0xff]
        %284 = vst [vmem:[%s215] sm:$0xff] %v282
        %285 = vst [vmem:[%s215 + $0x8] sm:$0xff] %v283
        %s286 = sand.u32 %s96, 1
        %s287 = scalar_lea.sflag [#allocation5], %s286
        %s288 = sand.u32 %s96, 1
        %s289 = smul.addr %s288, 16
        %s290 = scalar_lea.vmem [#allocation8], %s289
        // Predicated region
        $region41: #{tpu_custom_call.1} parent=27 // pred_check
          %p291 = pneg %p106
        $region42: #{tpu_custom_call.1} parent=27 // pred_check_branch
          %293 = sbr.rel (%p291) target = $region44
        $region43: #{tpu_custom_call.1} parent=27 // pred_region
          %s295 = ssub.s32 256, 256
          %296 = vsyncadd %s287, %s295
          %s297 = smul.addr %s26, 2
          %s298 = smul.addr %s27, 4
          %s299 = sadd.s32 %s297, %s298
          %s300 = smul.addr %s299, 128
          %s301 = scalar_lea.hbm %s2, %s300
          %s302 = sshll.u32 %s290, 4
          %s303 = int_to_ptr.vmem [resolvable:$true] %s302
          %308 = dma.vmem_to_hbm [thread:$0]  %s303, 256, %s301, %s287, 128, 128, 8
        $region44: #{tpu_custom_call.1} parent=27 // pred_fallthru
          _
      $region28: #{tpu_custom_call.1} parent=5 // pred_fallthru
        _
      %p309 = scmp.le.s32.totalorder 2, %s17
      // Predicated region
      $region45: #{tpu_custom_call.1} parent=5 // pred_check
        %p310 = pneg %p309
      $region46: #{tpu_custom_call.1} parent=5 // pred_check_branch
        %312 = sbr.rel (%p310) target = $region48
      $region47: #{tpu_custom_call.1} parent=5 // pred_region
        %s313 = ssub.s32 %s17, 2
        // Predicated region
        $region49: #{tpu_custom_call.1} parent=47 // pred_check
          %p314 = pneg %p112
        $region50: #{tpu_custom_call.1} parent=47 // pred_check_branch
          %316 = sbr.rel (%p314) target = $region52
        $region51: #{tpu_custom_call.1} parent=47 // pred_region
          %s317 = sand.u32 %s97, 1
          %s318 = scalar_lea.sflag [#allocation5], %s317
          %s319 = sand.u32 %s97, 1
          %s320 = smul.addr %s319, 16
          %s321 = scalar_lea.vmem [#allocation8], %s320
          %322 = dma.done %s318, 256
        $region52: #{tpu_custom_call.1} parent=47 // pred_fallthru
          _
      $region48: #{tpu_custom_call.1} parent=5 // pred_fallthru
        _
    $region6: #{tpu_custom_call.1} parent=1 // loop_footer
      %s21 = sadd.s32 1, %s17
    $region7: #{tpu_custom_call.1} parent=1 // loop_footer_branch
      %16 = sbr.rel target = $region3
    $region8: #{tpu_custom_call.1} parent=1 // loop_exit
      _
    %323 = vsyncpa [#allocation4], 1
    %s324 = scalar_lea.sflag [#allocation4], 1
    %325 = vsyncpa %s324, 1
    %326 = vsyncpa [#allocation7], 1
    %s327 = scalar_lea.sflag [#allocation7], 1
    %328 = vsyncpa %s327, 1
    %329 = vsyncpa [#allocation5], 1
    %s330 = scalar_lea.sflag [#allocation5], 1
    %331 = vsyncpa %s330, 1

</llo_original>
